<compile_context>
chip_gen: v7x
topology: tpu7x:2x2x1
jax: 0.10.0
libtpu: 0.0.40
codegen_flags: <defaults>
</compile_context>

<pallas_src>
import jax
import jax.numpy as jnp
from jax.experimental import pallas as pl
from jax.experimental.pallas import tpu as pltpu

_EPS = 1e-12                 # torch F.normalize default
_EPS_SQ = _EPS * _EPS        # clamp on the sum of squares (still normal in f32)
_VMEM_LIMIT = 32 * 1024 * 1024


# --------------------------------------------------------------------------- #
# Kernels
# --------------------------------------------------------------------------- #
def _fused_kernel(x_ref, o_ref):
    """Whole row resident: reduce + scale in one pass. Block = (TB, D)."""
    x = x_ref[...]
    xf = x.astype(jnp.float32)                       # f32 accumulation only
    ssq = jnp.sum(xf * xf, axis=-1, keepdims=True)   # (TB, 1)
    inv = jax.lax.rsqrt(jnp.maximum(ssq, _EPS_SQ))   # 1 / max(||x||, eps), EUP
    o_ref[...] = (x * inv.astype(x.dtype)).astype(o_ref.dtype)


def _ssq_inv_kernel(x_ref, inv_ref, acc_ref):
    """Pass 1 of the D-tiled path: per-row sum of squares -> inverse norm."""
    k = pl.program_id(1)

    @pl.when(k == 0)
    def _init():
        acc_ref[...] = jnp.zeros_like(acc_ref)

    xf = x_ref[...].astype(jnp.float32)
    acc_ref[...] += jnp.sum(xf * xf, axis=-1, keepdims=True)

    @pl.when(k == pl.num_programs(1) - 1)
    def _finalize():
        inv_ref[...] = jax.lax.rsqrt(jnp.maximum(acc_ref[...], _EPS_SQ))


def _scale_kernel(x_ref, inv_ref, o_ref):
    """Pass 2 of the D-tiled path: broadcast multiply by the inverse norm."""
    x = x_ref[...]
    o_ref[...] = (x * inv_ref[...].astype(x.dtype)).astype(o_ref.dtype)


# --------------------------------------------------------------------------- #
# Wrapper
# --------------------------------------------------------------------------- #
def _pad_cols(x, multiple):
    pad = (-x.shape[1]) % multiple
    if pad:
        x = jnp.pad(x, ((0, 0), (0, pad)))   # zero pad: does not change the norm
    return x


def flatten_norm(x, *, block_target_bytes=2 * 1024 * 1024,
                 max_block_bytes=4 * 1024 * 1024):
    """Mirrors FlattenNorm.forward: flatten(1) then L2-normalize along dim 1."""
    if x.ndim > 2:
        x = x.reshape(x.shape[0], -1)        # torch.flatten(1), row-major
    if x.ndim != 2:
        raise ValueError("FlattenNorm expects at least 2-D input")

    B, D = x.shape
    itemsize = jnp.dtype(x.dtype).itemsize
    out_dtype = x.dtype

    # Minimal legal row-tile: multiple of 8 sublanes, or the full batch if small.
    min_tb = B if B < 8 else 8
    d_lane = -(-D // 128) * 128              # D rounded up to a lane multiple
    row_bytes = d_lane * itemsize

    if min_tb * row_bytes <= max_block_bytes:
        # ---------------- fused single-pass path (common case) --------------
        xp = _pad_cols(x, 128)
        d_pad = xp.shape[1]

        if B < 8:
            tb = B
        else:
            tb_fit = max(1, block_target_bytes // row_bytes)
            tb = 8 if tb_fit < 8 else min((tb_fit // 8) * 8, B)

        nb = pl.cdiv(B, tb)
        out = pl.pallas_call(
            _fused_kernel,
            out_shape=jax.ShapeDtypeStruct((B, d_pad), out_dtype),
            grid=(nb,),
            in_specs=[pl.BlockSpec((tb, d_pad), lambda i: (i, 0))],
            out_specs=pl.BlockSpec((tb, d_pad), lambda i: (i, 0)),
            compiler_params=pltpu.CompilerParams(
                dimension_semantics=("parallel",),
                vmem_limit_bytes=_VMEM_LIMIT),
        )(xp)
    else:
        # ---------------- two-pass D-tiled path (huge rows) ------------------
        tb = min(B, 8)
        tk_fit = max(1, block_target_bytes // (tb * itemsize))
        tk = max(128, (tk_fit // 128) * 128)
        tk = min(tk, d_lane)

        xp = _pad_cols(x, tk)                # zero pad so the reduction is exact
        d_pad = xp.shape[1]
        nb = pl.cdiv(B, tb)
        nk = d_pad // tk

        inv = pl.pallas_call(
            _ssq_inv_kernel,
            out_shape=jax.ShapeDtypeStruct((B, 1), jnp.float32),
            grid=(nb, nk),
            in_specs=[pl.BlockSpec((tb, tk), lambda i, k: (i, k))],
            out_specs=pl.BlockSpec((tb, 1), lambda i, k: (i, 0)),
            scratch_shapes=[pltpu.VMEM((tb, 1), jnp.float32)],
            compiler_params=pltpu.CompilerParams(
                dimension_semantics=("parallel", "arbitrary"),
                vmem_limit_bytes=_VMEM_LIMIT),
        )(xp)

        out = pl.pallas_call(
            _scale_kernel,
            out_shape=jax.ShapeDtypeStruct((B, d_pad), out_dtype),
            grid=(nb, nk),
            in_specs=[pl.BlockSpec((tb, tk), lambda i, k: (i, k)),
                      pl.BlockSpec((tb, 1), lambda i, k: (i, 0))],
            out_specs=pl.BlockSpec((tb, tk), lambda i, k: (i, k)),
            compiler_params=pltpu.CompilerParams(
                dimension_semantics=("parallel", "parallel"),
                vmem_limit_bytes=_VMEM_LIMIT),
        )(xp, inv)

    if out.shape[1] != D:
        out = out[:, :D]
    return out


# --------------------------------------------------------------------------- #
# Reference + test
# --------------------------------------------------------------------------- #
def _reference(x):
    if x.ndim > 2:
        x = x.reshape(x.shape[0], -1)
    n = jnp.sqrt(jnp.sum(x.astype(jnp.float32) ** 2, axis=1, keepdims=True))
    return (x.astype(jnp.float32) / jnp.maximum(n, _EPS)).astype(x.dtype)


if __name__ == "__main__":
    key = jax.random.PRNGKey(0)
    # NCHW input consistent with the module's usage
    x = jax.random.normal(key, (2, 4, 16, 16), dtype=jnp.float32)

    y_ref = _reference(x)

    # Fused (single-pass) path
    y = flatten_norm(x)
    jax.block_until_ready(y)
    assert y.shape == (2, 4 * 16 * 16), y.shape
    assert jnp.allclose(y, y_ref, atol=1e-5, rtol=1e-5), "fused path mismatch"
    row_norms = jnp.sqrt(jnp.sum(y.astype(jnp.float32) ** 2, axis=1))
    assert jnp.allclose(row_norms, 1.0, atol=1e-5)

    # Force the D-tiled two-pass path on the same small input to exercise it.
    y2 = flatten_norm(x, max_block_bytes=0, block_target_bytes=1024)
    jax.block_until_ready(y2)
    assert y2.shape == (2, 4 * 16 * 16), y2.shape
    assert jnp.allclose(y2, y_ref, atol=1e-5, rtol=1e-5), "two-pass path mismatch"

    print("KERNEL_OK")
</pallas_src>

<mosaic_0001>
module attributes {stable_mosaic.version = 11 : i64} {
  func.func @_fused_kernel(%arg0: i32, %arg1: memref<2x1024xf32, #tpu.memory_space<vmem>>, %arg2: memref<2x1024xf32, #tpu.memory_space<vmem>>) attributes {dimension_semantics = [#tpu.dimension_semantics<parallel>], iteration_bounds = array<i64: 1>, scalar_prefetch = 0 : i64, scratch_operands = 0 : i64, tpu.core_type = #tpu.core_type<tc>, window_params = [{transform_indices = @transform_0, window_bounds = array<i64: 2, 1024>}, {transform_indices = @transform_1, window_bounds = array<i64: 2, 1024>}]} {
    %c0 = arith.constant 0 : index
    %c0_0 = arith.constant 0 : index
    %0 = vector.load %arg1[%c0, %c0_0] : memref<2x1024xf32, #tpu.memory_space<vmem>>, vector<2x1024xf32>
    %1 = arith.mulf %0, %0 : vector<2x1024xf32>
    %cst = arith.constant dense<0.000000e+00> : vector<2xf32>
    %2 = vector.multi_reduction <add>, %1, %cst [1] : vector<2x1024xf32> to vector<2xf32>
    %3 = vector.shape_cast %2 : vector<2xf32> to vector<2x1xf32>
    %cst_1 = arith.constant 1.000000e-24 : f32
    %4 = vector.broadcast %cst_1 : f32 to vector<2x1xf32>
    %5 = arith.maximumf %3, %4 : vector<2x1xf32>
    %6 = math.rsqrt %5 : vector<2x1xf32>
    %7 = vector.broadcast %6 : vector<2x1xf32> to vector<2x1024xf32>
    %8 = arith.mulf %0, %7 : vector<2x1024xf32>
    %c0_2 = arith.constant 0 : index
    %c0_3 = arith.constant 0 : index
    %9 = vector.load %arg2[%c0_2, %c0_3] : memref<2x1024xf32, #tpu.memory_space<vmem>>, vector<2x1024xf32>
    tpu.vector_store %arg2[%c0_2, %c0_3], %8 {strides = array<i32>} : memref<2x1024xf32, #tpu.memory_space<vmem>>, vector<2x1024xf32>,
    return
  }
  func.func @transform_0(%arg0: i32) -> (i32, i32) {
    %c0_i32 = arith.constant 0 : i32
    %c0_i32_0 = arith.constant 0 : i32
    return %arg0, %c0_i32 : i32, i32
  }
  func.func @transform_1(%arg0: i32) -> (i32, i32) {
    %c0_i32 = arith.constant 0 : i32
    %c0_i32_0 = arith.constant 0 : i32
    return %arg0, %c0_i32 : i32, i32
  }
}

</mosaic_0001>

<llo_original>
// kernel: tpu_custom_call.1
$region0: #{tpu_custom_call.1}
  #allocation0 [shape = 'u32[]', space=smem, size = 0x4, offset = 0x4, fixed_abs, tag = 'smem constant byte address 0x4 - core index']
  #allocation1 [shape = 'u32[144,128]{1,0:T(1,128)}', space=vmem, size = 0x12000, scoped, tag = 'internal scratch']
  %s0 = inlined_call_operand.hbm [shape: f32[2,1024], index: 0, kind: input, shape index: {}]
  %s1 = inlined_call_operand.hbm [shape: f32[2,1024], index: 1, kind: output, shape index: {}]
  %s2 = sld [smem:[#allocation0]]
  $region18: #{tpu_custom_call.1} parent=0
    _
  %s4 = ssub.s32 1, %s2
  %s5 = scalar_select 0, %s4, %s2
  $region1: #{tpu_custom_call.1} parent=0
    #allocation2 [shape = 'u8[8192]{0}', space=vmem, size = 0x2000, scoped, tag = 'input window, operand 0, single buffered']
    #allocation3 [shape = 's32[1]{0}', space=sflag, size = 0x4, scoped, tag = 'scoped memory for tpu_custom_call.1']
    #allocation4 [shape = 's32[1]{0}', space=sflag, size = 0x4, scoped, tag = 'scoped memory for tpu_custom_call.1']
    #allocation5 [shape = 'u8[8192]{0}', space=vmem, size = 0x2000, scoped, tag = 'output window, operand 0, single buffered']
    %6 = vsyncpa [#allocation3], 0
    %7 = vsyncpa [#allocation4], 0
    // Predicated region
    $region2: #{tpu_custom_call.1} parent=1 // pred_check
      _
    $region3: #{tpu_custom_call.1} parent=1 // pred_check_branch
      %9 = sbr.rel (0) target = $region5
    $region4: #{tpu_custom_call.1} parent=1 // pred_region
      %s11 = ssub.s32 256, 256
      %12 = vsyncadd [#allocation3], %s11
      %s14 = sshll.u32 [#allocation2], 4
      %s15 = int_to_ptr.vmem [resolvable:$true] %s14
      %17 = dma.hbm_to_vmem [thread:$0]  %s0, 256, %s15, [#allocation3]
    $region5: #{tpu_custom_call.1} parent=1 // pred_fallthru
      _
    // Predicated region
    $region6: #{tpu_custom_call.1} parent=1 // pred_check
      _
    $region7: #{tpu_custom_call.1} parent=1 // pred_check_branch
      %19 = sbr.rel (0) target = $region9
    $region8: #{tpu_custom_call.1} parent=1 // pred_region
      %20 = dma.done [#allocation3], 256
    $region9: #{tpu_custom_call.1} parent=1 // pred_fallthru
      _
    %v21 = vld [vmem:[#allocation2] sm:$0xff]
    %v22 = vld [vmem:[#allocation2 + $0x8] sm:$0xff]
    %v23 = vmul.f32 %v21, %v21
    %v24 = vmul.f32 %v22, %v22
    %v27 = vcombine.high %v23, %v23
    %v29 = vunpack.c.l.s4 1983009808
    %v30 = vunpack.c.0.s8 %v29
    %v31 = vlaneseq
    %v32 = vshrl.u32 %v31, 7
    %v33 = vsub.s32 %v30, %v32
    %v34 = vrot.slane %v23, %v33
    %v36 = vunpack.c.l.s4 1983009808
    %v37 = vunpack.c.0.s8 %v36
    %v38 = vlaneseq
    %v39 = vshrl.u32 %v38, 7
    %v40 = vsub.s32 %v37, %v39
    %v41 = vrot.slane %v27, %v40
    %v42 = vcombine.high %v34, %v34
    %v43 = vcombine.high %v41, %v41
    %v44 = vcombine.high %v24, %v24
    %v46 = vunpack.c.l.s4 1983009808
    %v47 = vunpack.c.0.s8 %v46
    %v48 = vlaneseq
    %v49 = vshrl.u32 %v48, 7
    %v50 = vsub.s32 %v47, %v49
    %v51 = vrot.slane %v24, %v50
    %v53 = vunpack.c.l.s4 1983009808
    %v54 = vunpack.c.0.s8 %v53
    %v55 = vlaneseq
    %v56 = vshrl.u32 %v55, 7
    %v57 = vsub.s32 %v54, %v56
    %v58 = vrot.slane %v44, %v57
    %v59 = vcombine.high %v51, %v51
    %v60 = vcombine.high %v58, %v58
    %vm69 = vcmask 1041408
    %v70 = vsel %vm69, %v34, 0.0
    %v71 = vsel %vm69, %v42, 0.0
    %v72 = vadd.f32 %v70, %v71
    %v73 = vsel %vm69, %v41, 0.0
    %v74 = vadd.f32 %v72, %v73
    %v75 = vsel %vm69, %v43, 0.0
    %v76 = vadd.f32 %v74, %v75
    %v77 = vsel %vm69, %v51, 0.0
    %v78 = vadd.f32 %v76, %v77
    %v79 = vsel %vm69, %v59, 0.0
    %v80 = vadd.f32 %v78, %v79
    %v81 = vsel %vm69, %v58, 0.0
    %v82 = vadd.f32 %v80, %v81
    %v83 = vsel %vm69, %v60, 0.0
    %v84 = vadd.f32 %v82, %v83
    %85 = vadd.xlane.f32.xlu0 %v84
    %v86 = vpop.xlane.xlu0 %85
    %v87 = vmax.f32 %v86, 1e-24
    %v88 = vrsqrt.pop %v87
    %v91 = vunpack.c.l.s4 269488144
    %v92 = vunpack.c.0.s8 %v91
    %v93 = vlaneseq
    %v94 = vshrl.u32 %v93, 7
    %v95 = vsub.s32 %v92, %v94
    %v96 = vrot.slane %v88, %v95
    %v98 = vmul.f32 %v21, %v96
    %v99 = vmul.f32 %v22, %v96
    %100 = vst [vmem:[#allocation5] sm:$0xff] %v98
    %101 = vst [vmem:[#allocation5 + $0x8] sm:$0xff] %v99
    // Predicated region
    $region10: #{tpu_custom_call.1} parent=1 // pred_check
      _
    $region11: #{tpu_custom_call.1} parent=1 // pred_check_branch
      %103 = sbr.rel (0) target = $region13
    $region12: #{tpu_custom_call.1} parent=1 // pred_region
      %s105 = ssub.s32 256, 256
      %106 = vsyncadd [#allocation4], %s105
      %s108 = sshll.u32 [#allocation5], 4
      %s109 = int_to_ptr.vmem [resolvable:$true] %s108
      %111 = dma.vmem_to_hbm [thread:$0]  %s109, 256, %s1, [#allocation4]
    $region13: #{tpu_custom_call.1} parent=1 // pred_fallthru
      _
    // Predicated region
    $region14: #{tpu_custom_call.1} parent=1 // pred_check
      _
    $region15: #{tpu_custom_call.1} parent=1 // pred_check_branch
      %113 = sbr.rel (0) target = $region17
    $region16: #{tpu_custom_call.1} parent=1 // pred_region
      %114 = dma.done [#allocation4], 256
    $region17: #{tpu_custom_call.1} parent=1 // pred_fallthru
      _
    %115 = vsyncpa [#allocation3], 1
    %116 = vsyncpa [#allocation4], 1

</llo_original>
